<compile_context>
chip_gen: v7x
topology: tpu7x:2x2x1
jax: 0.10.0
libtpu: 0.0.40
codegen_flags: <defaults>
</compile_context>

<pallas_src>
import functools

import jax
import jax.numpy as jnp
from jax.experimental import pallas as pl
from jax.experimental.pallas import tpu as pltpu


def _round_up(x, m):
    return ((x + m - 1) // m) * m


def _embed_linear_kernel(x_ref, w_ref, b_ref, o_ref):
    # Hot path: skinny matmul (f32 accumulate on the MXU) + bias add on the VPU.
    acc = jnp.dot(x_ref[...], w_ref[...], preferred_element_type=jnp.float32)
    o_ref[...] = (acc + b_ref[...]).astype(o_ref.dtype)


@functools.partial(jax.jit, static_argnames=("tm",))
def embed_linear(x_2d, w, b, *, tm=2048):
    """y = x_2d @ w + b  with x_2d: [M, K], w: [K, N], b: [1, N] -> [M, N]."""
    M, K = x_2d.shape
    K2, N = w.shape
    assert K == K2

    # Row-tile size: at most `tm`, padded to the sublane granule (8).
    TM = min(tm, _round_up(M, 8))
    M_pad = _round_up(M, TM)
    if M_pad != M:
        x_2d = jnp.pad(x_2d, ((0, M_pad - M), (0, 0)))
    grid_m = M_pad // TM

    cost = pl.CostEstimate(
        flops=2 * M_pad * K * N,
        transcendentals=0,
        bytes_accessed=4 * (M_pad * K + K * N + M_pad * N),
    )

    y = pl.pallas_call(
        _embed_linear_kernel,
        out_shape=jax.ShapeDtypeStruct((M_pad, N), x_2d.dtype),
        grid_spec=pltpu.PrefetchScalarGridSpec(
            num_scalar_prefetch=0,
            grid=(grid_m,),
            in_specs=[
                # Streamed row slab.
                pl.BlockSpec((TM, K), lambda i: (i, 0)),
                # Weight / bias: constant block index -> stay resident in VMEM.
                pl.BlockSpec((K, N), lambda i: (0, 0)),
                pl.BlockSpec((1, N), lambda i: (0, 0)),
            ],
            out_specs=pl.BlockSpec((TM, N), lambda i: (i, 0)),
        ),
        compiler_params=pltpu.CompilerParams(
            # Rows are fully independent -> shard row tiles across TensorCores
            # on v7x (megacore); harmless on single-TC v5e/v6e.
            dimension_semantics=("parallel",),
            vmem_limit_bytes=32 * 1024 * 1024,
        ),
        cost_estimate=cost,
    )(x_2d, w, b)

    if M_pad != M:
        y = y[:M]
    return y


class SummaryNetworkPallas:
    """JAX/Pallas port of Summary_Network.forward (== self.embed(X))."""

    def __init__(self, state_dim, n_embd=128, key=jax.random.PRNGKey(0)):
        self.state_dim = state_dim
        self.n_embd = n_embd
        # Deterministic init mimicking torch.nn.Linear's uniform(-1/sqrt(fan_in), ...).
        kw, kb = jax.random.split(key)
        bound = 1.0 / jnp.sqrt(jnp.float32(state_dim))
        # stored as W^T: [state_dim, n_embd]
        self.w = jax.random.uniform(kw, (state_dim, n_embd), jnp.float32, -bound, bound)
        self.b = jax.random.uniform(kb, (1, n_embd), jnp.float32, -bound, bound)

    def forward(self, X, *, tm=2048):
        # X: [B, n, state_dim] -> [B, n, n_embd]
        B, n, d = X.shape
        assert d == self.state_dim
        x_2d = X.reshape(B * n, d)
        y_2d = embed_linear(x_2d, self.w, self.b, tm=tm)
        return y_2d.reshape(B, n, self.n_embd)

    # TODO(synk): Prediction_Network heads (predict_forward) are not part of
    # Summary_Network.forward; only the embed hot path is implemented in Pallas.


def _reference_forward(X, w, b):
    return jnp.einsum("bnd,de->bne", X, w) + b[0]


if __name__ == "__main__":
    key = jax.random.PRNGKey(0)
    k_param, k_x, k_x2 = jax.random.split(key, 3)

    B, n, state_dim, n_embd = 2, 8, 32, 128
    model = SummaryNetworkPallas(state_dim, n_embd=n_embd, key=k_param)

    # Small demo shape (single grid step).
    X = jax.random.normal(k_x, (B, n, state_dim), jnp.float32)
    y = jax.block_until_ready(model.forward(X))
    y_ref = _reference_forward(X, model.w, model.b)
    assert y.shape == (B, n, n_embd)
    assert jnp.allclose(y, y_ref, atol=1e-4, rtol=1e-4), "mismatch vs reference (single block)"

    # Re-validate the tiled path across multiple grid steps (tiny tm forces >1 block),
    # including a ragged remainder row count.
    X2 = jax.random.normal(k_x2, (3, 7, state_dim), jnp.float32)  # M = 21 rows
    y2 = jax.block_until_ready(model.forward(X2, tm=8))
    y2_ref = _reference_forward(X2, model.w, model.b)
    assert jnp.allclose(y2, y2_ref, atol=1e-4, rtol=1e-4), "mismatch vs reference (multi block)"

    print("KERNEL_OK")
</pallas_src>

<mosaic_0001>
module attributes {stable_mosaic.version = 11 : i64} {
  func.func @_embed_linear_kernel(%arg0: i32, %arg1: memref<16x32xf32, #tpu.memory_space<vmem>>, %arg2: memref<32x128xf32, #tpu.memory_space<vmem>>, %arg3: memref<1x128xf32, #tpu.memory_space<vmem>>, %arg4: memref<16x128xf32, #tpu.memory_space<vmem>>) attributes {dimension_semantics = [#tpu.dimension_semantics<parallel>], iteration_bounds = array<i64: 1>, scalar_prefetch = 0 : i64, scratch_operands = 0 : i64, tpu.core_type = #tpu.core_type<tc>, window_params = [{transform_indices = @transform_0, window_bounds = array<i64: 16, 32>}, {pipeline_mode = #tpu.pipeline_mode<synchronous>, transform_indices = @transform_1, window_bounds = array<i64: 32, 128>}, {pipeline_mode = #tpu.pipeline_mode<synchronous>, transform_indices = @transform_2, window_bounds = array<i64: 1, 128>}, {transform_indices = @transform_3, window_bounds = array<i64: 16, 128>}]} {
    %c0 = arith.constant 0 : index
    %c0_0 = arith.constant 0 : index
    %0 = vector.load %arg1[%c0, %c0_0] : memref<16x32xf32, #tpu.memory_space<vmem>>, vector<16x32xf32>
    %c0_1 = arith.constant 0 : index
    %c0_2 = arith.constant 0 : index
    %1 = vector.load %arg2[%c0_1, %c0_2] : memref<32x128xf32, #tpu.memory_space<vmem>>, vector<32x128xf32>
    %cst = arith.constant dense<0.000000e+00> : vector<16x128xf32>
    %2 = tpu.matmul %0, %1, %cst {dimension_numbers = #tpu.dot_dimension_numbers<[1], [0], [0], [1], [0, 0, 1, 1], [], []>} : vector<16x32xf32>, vector<32x128xf32>, vector<16x128xf32> -> vector<16x128xf32>
    %c0_3 = arith.constant 0 : index
    %c0_4 = arith.constant 0 : index
    %3 = vector.load %arg3[%c0_3, %c0_4] : memref<1x128xf32, #tpu.memory_space<vmem>>, vector<1x128xf32>
    %4 = vector.broadcast %3 : vector<1x128xf32> to vector<16x128xf32>
    %5 = arith.addf %2, %4 : vector<16x128xf32>
    %c0_5 = arith.constant 0 : index
    %c0_6 = arith.constant 0 : index
    %6 = vector.load %arg4[%c0_5, %c0_6] : memref<16x128xf32, #tpu.memory_space<vmem>>, vector<16x128xf32>
    tpu.vector_store %arg4[%c0_5, %c0_6], %5 {strides = array<i32>} : memref<16x128xf32, #tpu.memory_space<vmem>>, vector<16x128xf32>,
    return
  }
  func.func @transform_0(%arg0: i32) -> (i32, i32) {
    %c0_i32 = arith.constant 0 : i32
    %c0_i32_0 = arith.constant 0 : i32
    return %arg0, %c0_i32 : i32, i32
  }
  func.func @transform_1(%arg0: i32) -> (i32, i32) {
    %c0_i32 = arith.constant 0 : i32
    %c0_i32_0 = arith.constant 0 : i32
    %c0_i32_1 = arith.constant 0 : i32
    return %c0_i32, %c0_i32_0 : i32, i32
  }
  func.func @transform_2(%arg0: i32) -> (i32, i32) {
    %c0_i32 = arith.constant 0 : i32
    %c0_i32_0 = arith.constant 0 : i32
    %c0_i32_1 = arith.constant 0 : i32
    return %c0_i32, %c0_i32_0 : i32, i32
  }
  func.func @transform_3(%arg0: i32) -> (i32, i32) {
    %c0_i32 = arith.constant 0 : i32
    %c0_i32_0 = arith.constant 0 : i32
    return %arg0, %c0_i32 : i32, i32
  }
}

</mosaic_0001>

<llo_original>
// kernel: embed_linear.1
$region0: #{embed_linear.1}
  #allocation0 [shape = 'u32[]', space=smem, size = 0x4, offset = 0x4, fixed_abs, tag = 'smem constant byte address 0x4 - core index']
  #allocation1 [shape = 'u32[144,128]{1,0:T(1,128)}', space=vmem, size = 0x12000, scoped, tag = 'internal scratch']
  %s0 = inlined_call_operand.hbm [shape: f32[16,32], index: 0, kind: input, shape index: {}]
  %s1 = inlined_call_operand.hbm [shape: f32[32,128], index: 1, kind: input, shape index: {}]
  %s2 = inlined_call_operand.vmem [shape: f32[1,128], index: 2, kind: input, shape index: {}]
  %s3 = inlined_call_operand.hbm [shape: f32[16,128], index: 3, kind: output, shape index: {}]
  %s4 = sld [smem:[#allocation0]]
  $region30: #{embed_linear.1} parent=0
    _
  %s6 = ssub.s32 1, %s4
  %s7 = scalar_select 0, %s6, %s4
  $region1: #{embed_linear.1} parent=0
    #allocation2 [shape = 'u8[8192]{0}', space=vmem, size = 0x2000, scoped, tag = 'input window, operand 0, single buffered']
    #allocation3 [shape = 's32[1]{0}', space=sflag, size = 0x4, scoped, tag = 'scoped memory for embed_linear.1']
    #allocation4 [shape = 's32[1]{0}', space=sflag, size = 0x4, scoped, tag = 'scoped memory for embed_linear.1']
    #allocation5 [shape = 'u8[16384]{0}', space=vmem, size = 0x4000, scoped, tag = 'input window, operand 1, single buffered']
    #allocation6 [shape = 's32[1]{0}', space=sflag, size = 0x4, scoped, tag = 'scoped memory for embed_linear.1']
    #allocation7 [shape = 'u8[8192]{0}', space=vmem, size = 0x2000, scoped, tag = 'output window, operand 0, single buffered']
    %8 = vsyncpa [#allocation3], 0
    %9 = vsyncpa [#allocation6], 0
    %10 = vsyncpa [#allocation4], 0
    // Predicated region
    $region2: #{embed_linear.1} parent=1 // pred_check
      _
    $region3: #{embed_linear.1} parent=1 // pred_check_branch
      %12 = sbr.rel (0) target = $region5
    $region4: #{embed_linear.1} parent=1 // pred_region
      %s14 = ssub.s32 256, 256
      %15 = vsyncadd [#allocation3], %s14
      %s16 = sshll.u32 [#allocation2], 4
      %s17 = int_to_ptr.vmem [resolvable:$true] %s16
      %22 = dma.hbm_to_vmem [thread:$0]  %s0, 256, %s17, [#allocation3], 128, 128, 8
    $region5: #{embed_linear.1} parent=1 // pred_fallthru
      _
    // Predicated region
    $region6: #{embed_linear.1} parent=1 // pred_check
      _
    $region7: #{embed_linear.1} parent=1 // pred_check_branch
      %24 = sbr.rel (0) target = $region9
    $region8: #{embed_linear.1} parent=1 // pred_region
      %s26 = ssub.s32 512, 512
      %27 = vsyncadd [#allocation6], %s26
      %s28 = sshll.u32 [#allocation5], 4
      %s29 = int_to_ptr.vmem [resolvable:$true] %s28
      %34 = dma.hbm_to_vmem [thread:$0]  %s1, 512, %s29, [#allocation6], 128, 128, 8
    $region9: #{embed_linear.1} parent=1 // pred_fallthru
      _
    // Predicated region
    $region10: #{embed_linear.1} parent=1 // pred_check
      _
    $region11: #{embed_linear.1} parent=1 // pred_check_branch
      %36 = sbr.rel (0) target = $region13
    $region12: #{embed_linear.1} parent=1 // pred_region
      _
    $region13: #{embed_linear.1} parent=1 // pred_fallthru
      _
    // Predicated region
    $region14: #{embed_linear.1} parent=1 // pred_check
      _
    $region15: #{embed_linear.1} parent=1 // pred_check_branch
      %38 = sbr.rel (0) target = $region17
    $region16: #{embed_linear.1} parent=1 // pred_region
      %39 = dma.done [#allocation3], 256
    $region17: #{embed_linear.1} parent=1 // pred_fallthru
      _
    // Predicated region
    $region18: #{embed_linear.1} parent=1 // pred_check
      _
    $region19: #{embed_linear.1} parent=1 // pred_check_branch
      %41 = sbr.rel (0) target = $region21
    $region20: #{embed_linear.1} parent=1 // pred_region
      %42 = dma.done [#allocation6], 512
    $region21: #{embed_linear.1} parent=1 // pred_fallthru
      _
    %v43 = vld [vmem:[#allocation2] sm:$0xff]
    %v44 = vld [vmem:[#allocation2 + $0x8] sm:$0xff]
    %v45 = vld [vmem:[#allocation5] sm:$0xff]
    %v46 = vld [vmem:[#allocation5 + $0x8] sm:$0xff]
    %v47 = vld [vmem:[#allocation5 + $0x10] sm:$0xff]
    %v48 = vld [vmem:[#allocation5 + $0x18] sm:$0xff]
    %v49 = vld [vmem:[%s2] sm:$0x1]
    %v51 = vlaneseq
    %v52 = vshrl.u32 %v51, 7
    %v53 = vsub.s32 0, %v52
    %v54 = vrot.slane %v49, %v53
    %vm56 = vcmask 261120
    %v58 = vsel %vm56, %v43, 0
    %v61 = vsel %vm56, %v44, 0
    %63 = vmatprep.subr.mxu0 0.0
    %64 = vmatpush1.msra.mxu0 %v45
    %65 = vmatprep.subr.mxu0 0.0
    %66 = vmatpush1.msra.mxu0 %v46
    %67 = vmatprep.subr.mxu0 0.0
    %68 = vmatpush1.msra.mxu0 %v47
    %69 = vmatprep.subr.mxu0 0.0
    %70 = vmatpush1.msra.mxu0 %v48
    %71 = vmatprep.subr.mxu0 0.0
    %72 = vmatpush1.msra.mxu0 0.0
    %73 = vmatprep.subr.mxu0 0.0
    %74 = vmatpush1.msra.mxu0 0.0
    %75 = vmatprep.subr.mxu0 0.0
    %76 = vmatpush1.msra.mxu0 0.0
    %77 = vmatprep.subr.mxu0 0.0
    %78 = vmatpush1.msra.mxu0 0.0
    %79 = vmatprep.subr.mxu0 0.0
    %80 = vmatpush1.msra.mxu0 0.0
    %81 = vmatprep.subr.mxu0 0.0
    %82 = vmatpush1.msra.mxu0 0.0
    %83 = vmatprep.subr.mxu0 0.0
    %84 = vmatpush1.msra.mxu0 0.0
    %85 = vmatprep.subr.mxu0 0.0
    %86 = vmatpush1.msra.mxu0 0.0
    %87 = vmatprep.subr.mxu0 0.0
    %88 = vmatpush1.msra.mxu0 0.0
    %89 = vmatprep.subr.mxu0 0.0
    %90 = vmatpush1.msra.mxu0 0.0
    %91 = vmatprep.subr.mxu0 0.0
    %92 = vmatpush1.msra.mxu0 0.0
    %93 = vmatprep.subr.mxu0 0.0
    %94 = vmatpush1.msra.mxu0 0.0
    %95 = vmatprep.subr.mxu0 0.0
    %96 = vmatpush1.msra.mxu0 0.0
    %97 = vmatprep.subr.mxu0 0.0
    %98 = vmatpush1.msra.mxu0 0.0
    %99 = vmatprep.subr.mxu0 0.0
    %100 = vmatpush1.msra.mxu0 0.0
    %101 = vmatprep.subr.mxu0 0.0
    %102 = vmatpush1.msra.mxu0 0.0
    %103 = vmatprep.subr.mxu0 0.0
    %104 = vmatpush1.msra.mxu0 0.0
    %105 = vmatprep.subr.mxu0 0.0
    %106 = vmatpush1.msra.mxu0 0.0
    %107 = vmatprep.subr.mxu0 0.0
    %108 = vmatpush1.msra.mxu0 0.0
    %109 = vmatprep.subr.mxu0 0.0
    %110 = vmatpush1.msra.mxu0 0.0
    %111 = vmatprep.subr.mxu0 0.0
    %112 = vmatpush1.msra.mxu0 0.0
    %113 = vmatprep.subr.mxu0 0.0
    %114 = vmatpush1.msra.mxu0 0.0
    %115 = vmatprep.subr.mxu0 0.0
    %116 = vmatpush1.msra.mxu0 0.0
    %117 = vmatprep.subr.mxu0 0.0
    %118 = vmatpush1.msra.mxu0 0.0
    %119 = vmatprep.subr.mxu0 0.0
    %120 = vmatpush1.msra.mxu0 0.0
    %121 = vmatprep.subr.mxu0 0.0
    %122 = vmatpush1.msra.mxu0 0.0
    %123 = vmatprep.subr.mxu0 0.0
    %124 = vmatpush1.msra.mxu0 0.0
    %125 = vmatprep.subr.mxu0 0.0
    %126 = vmatpush1.msra.mxu0 0.0
    %127 = vmatprep.mubr.f32.mxu0 0.0
    %128 = vmatmul.mubr.f32.gmra.mrb[0].mxu0 %v58
    %v129 = vpop.f32.mrb[0].mxu0
    %v130 = vadd.f32 %v54, %v129
    %v131 = vpop.f32.mrb[0].mxu0
    %132 = vmatprep.mubr.f32.mxu0 0.0
    %133 = vmatmul.mubr.f32.gmra.mrb[0].mxu0 %v61
    %v134 = vpop.f32.mrb[0].mxu0
    %v135 = vadd.f32 %v54, %v134
    %v136 = vpop.f32.mrb[0].mxu0
    %137 = vdwg.mxu0
    %138 = vst [vmem:[#allocation7] sm:$0xff] %v130
    %139 = vst [vmem:[#allocation7 + $0x8] sm:$0xff] %v135
    // Predicated region
    $region22: #{embed_linear.1} parent=1 // pred_check
      _
    $region23: #{embed_linear.1} parent=1 // pred_check_branch
      %141 = sbr.rel (0) target = $region25
    $region24: #{embed_linear.1} parent=1 // pred_region
      %s143 = ssub.s32 256, 256
      %144 = vsyncadd [#allocation4], %s143
      %s145 = sshll.u32 [#allocation7], 4
      %s146 = int_to_ptr.vmem [resolvable:$true] %s145
      %151 = dma.vmem_to_hbm [thread:$0]  %s146, 256, %s3, [#allocation4], 128, 128, 8
    $region25: #{embed_linear.1} parent=1 // pred_fallthru
      _
    // Predicated region
    $region26: #{embed_linear.1} parent=1 // pred_check
      _
    $region27: #{embed_linear.1} parent=1 // pred_check_branch
      %153 = sbr.rel (0) target = $region29
    $region28: #{embed_linear.1} parent=1 // pred_region
      %154 = dma.done [#allocation4], 256
    $region29: #{embed_linear.1} parent=1 // pred_fallthru
      _
    %155 = vsyncpa [#allocation3], 1
    %156 = vsyncpa [#allocation6], 1
    %157 = vsyncpa [#allocation4], 1

</llo_original>
